<compile_context>
chip_gen: v6e
topology: v6e:2x2x1
jax: 0.10.0
libtpu: 0.0.40
codegen_flags: <defaults>
</compile_context>

<pallas_src>
import functools
import math

import jax
import jax.numpy as jnp
from jax.experimental import pallas as pl
from jax.experimental.pallas import tpu as pltpu


def _attention_kernel(x_ref, w_ref, b_ref, o_ref, *, use_mxu: bool):
    bt, s, f = x_ref.shape
    x = x_ref[...]                                    # (bt, s, f) native dtype

    if use_mxu:
        # s % 8 == 0 -> the (bt, s, f) <-> (bt*s, f) reshapes are tile aligned
        # (no relayout).  The MXU matmul against the lane-replicated weight
        # yields (bt*s, 128) scores with all 128 lanes identical.
        scores = jnp.dot(x.reshape(bt * s, f), w_ref[...],
                         preferred_element_type=jnp.float32)
        scores = scores.reshape(bt, s, 128)
        bias = b_ref[...].reshape(1, s, 128)          # lane-replicated bias
    else:
        # Fallback: VPU multiply + lane reduce (masked over the padded lanes).
        w = w_ref[...].reshape(1, 1, f)               # f32
        scores = jnp.sum(x.astype(jnp.float32) * w, axis=-1, keepdims=True)
        bias = b_ref[:, 0:1].reshape(1, s, 1)

    eij = jnp.tanh(scores + bias)                     # bounded in [-1, 1]
    a = jnp.exp(eij)                                  # <= e, no overflow
    denom = jnp.sum(a, axis=1, keepdims=True)         # (bt, 1, R) f32
    # Exact reciprocal for closer parity with the torch reference.
    attn = a * pl.reciprocal(denom, approx=False) + 1e-10

    r = attn.shape[-1]
    # All lanes of attn are equal, so for f <= r a plain slice lines up with
    # x's lanes (no broadcast); for f > r broadcast from lane 0.
    attn_x = attn[:, :, :f] if f <= r else attn[:, :, :1]

    out = jnp.sum(x.astype(jnp.float32) * attn_x, axis=1)   # (bt, f) f32 accum
    o_ref[...] = out.astype(o_ref.dtype)


def _vmem_budget():
    """(vmem_limit_bytes, per-x-block byte budget), sized per TPU generation."""
    phys = 64 << 20                       # conservative default: v7x physical
    try:
        info = pltpu.get_tpu_info()
        cap = getattr(info, "vmem_capacity_bytes", None)
        if cap:
            phys = int(cap)
    except Exception:
        pass
    vmem_limit = min((phys * 3) // 4, 96 << 20)   # ~48 MiB v7x, 96 MiB v5e/v6e
    block_budget = min(8 << 20, vmem_limit // 8)  # ~6 MiB v7x, 8 MiB v5e/v6e
    return vmem_limit, block_budget


def _choose_batch_tile(B, S, F, itemsize, block_budget):
    s_pad = ((S + 7) // 8) * 8
    f_pad = ((F + 127) // 128) * 128
    row_bytes = s_pad * f_pad * itemsize          # padded VMEM bytes per batch row
    bt = max(1, int(block_budget // row_bytes))
    # Keep >= ~8 grid steps so the BlockSpec pipeline overlaps DMA with compute
    # and v7x can shard the batch across its two TensorCores.
    bt = min(bt, max(1, (B + 7) // 8))
    if bt >= B or B <= 8:
        return B                                  # single / full-batch blocks
    # Output block (bt, F): second-to-last dim must be sublane aligned when the
    # block does not cover the full batch.  (If this overshoots the byte
    # budget, the wrapper raises vmem_limit_bytes accordingly.)
    bt = max(8, (bt // 8) * 8)
    return min(bt, B)


def attention_forward(x, weight, bias):
    """x: (B, S, F), weight: (F, 1), bias: (S,) -> (B, F)."""
    B, S, F = x.shape
    dtype = x.dtype
    itemsize = jnp.dtype(dtype).itemsize
    use_mxu = (S % 8 == 0)

    vmem_limit, block_budget = _vmem_budget()
    bt = _choose_batch_tile(B, S, F, itemsize, block_budget)

    # Make sure the declared VMEM limit covers the double-buffered blocks plus
    # the in-kernel f32 temporaries (raises the limit if the 8-row sublane
    # floor exceeded the per-buffer budget).  For pathologically large S*F a
    # second grid axis over S/F would be needed instead.
    s_pad = ((S + 7) // 8) * 8
    f_pad = ((F + 127) // 128) * 128
    x_block = bt * s_pad * f_pad * itemsize
    f32_block = bt * s_pad * f_pad * 4
    score_block = bt * s_pad * 128 * 4
    out_block = bt * f_pad * itemsize
    needed = 2 * x_block + 2 * out_block + 3 * score_block + 2 * f32_block + (2 << 20)
    vmem_limit = int(max(vmem_limit, needed))

    # Tiny resident operands, pre-laid-out so the kernel needs no relayouts:
    w_col = weight.reshape(F)
    if use_mxu:
        # Lane-replicated weight, pre-cast to x.dtype for the MXU.
        w_arg = jnp.broadcast_to(w_col.astype(dtype)[:, None], (F, 128))
        w_spec = pl.BlockSpec((F, 128), lambda i: (0, 0))
    else:
        w_arg = w_col.astype(jnp.float32)[None, :]          # (1, F) f32
        w_spec = pl.BlockSpec((1, F), lambda i: (0, 0))
    # Bias with step_dim on sublanes (and lanes replicated) -> free reshape to
    # (1, S, .) inside the kernel.
    b_arg = jnp.broadcast_to(bias.astype(jnp.float32)[:, None], (S, 128))
    b_spec = pl.BlockSpec((S, 128), lambda i: (0, 0))

    grid = (pl.cdiv(B, bt),)
    return pl.pallas_call(
        functools.partial(_attention_kernel, use_mxu=use_mxu),
        out_shape=jax.ShapeDtypeStruct((B, F), dtype),
        grid_spec=pltpu.PrefetchScalarGridSpec(
            num_scalar_prefetch=0,
            grid=grid,
            in_specs=[
                pl.BlockSpec((bt, S, F), lambda i: (i, 0, 0)),   # no x padding
                w_spec,
                b_spec,
            ],
            out_specs=pl.BlockSpec((bt, F), lambda i: (i, 0)),
        ),
        compiler_params=pltpu.CompilerParams(
            dimension_semantics=("parallel",),     # batch tiles across TCs (v7x)
            vmem_limit_bytes=vmem_limit,
        ),
    )(x, w_arg, b_arg)


def attention_reference(x, weight, bias):
    B, S, F = x.shape
    eij = (x.reshape(-1, F) @ weight).reshape(B, S) + bias
    eij = jnp.tanh(eij)
    a = jnp.exp(eij)
    a = a / jnp.sum(a, axis=1, keepdims=True) + 1e-10
    return jnp.sum(x * a[..., None], axis=1)


# TODO(synk): the optional `mask` argument of Attention.forward (masked
# softmax) is not implemented; this kernel covers the mask=None path.

if __name__ == "__main__":
    # Small shapes consistent with the module: batch=2, step_dim=8, feature_dim=32
    B, S, F = 2, 8, 32
    key = jax.random.PRNGKey(0)
    kx, kw = jax.random.split(key)

    x = jax.random.normal(kx, (B, S, F), dtype=jnp.float32)

    # Deterministic xavier_uniform_ init for weight of shape (feature_dim, 1):
    # fan_in = 1, fan_out = feature_dim -> bound = sqrt(6 / (feature_dim + 1))
    bound = math.sqrt(6.0 / (F + 1))
    weight = jax.random.uniform(kw, (F, 1), jnp.float32, -bound, bound)
    bias = jnp.zeros((S,), jnp.float32)

    out = jax.block_until_ready(attention_forward(x, weight, bias))
    ref = attention_reference(x, weight, bias)

    assert out.shape == (B, F)
    assert jnp.allclose(out, ref, atol=1e-4, rtol=1e-4), "mismatch vs reference"

    print("KERNEL_OK")
</pallas_src>

<mosaic_0001>
module attributes {stable_mosaic.version = 11 : i64} {
  func.func @_attention_kernel(%arg0: i32, %arg1: memref<2x8x32xf32, #tpu.memory_space<vmem>>, %arg2: memref<32x128xf32, #tpu.memory_space<vmem>>, %arg3: memref<8x128xf32, #tpu.memory_space<vmem>>, %arg4: memref<2x32xf32, #tpu.memory_space<vmem>>) attributes {dimension_semantics = [#tpu.dimension_semantics<parallel>], iteration_bounds = array<i64: 1>, scalar_prefetch = 0 : i64, scratch_operands = 0 : i64, tpu.core_type = #tpu.core_type<tc>, window_params = [{transform_indices = @transform_0, window_bounds = array<i64: 2, 8, 32>}, {pipeline_mode = #tpu.pipeline_mode<synchronous>, transform_indices = @transform_1, window_bounds = array<i64: 32, 128>}, {pipeline_mode = #tpu.pipeline_mode<synchronous>, transform_indices = @transform_2, window_bounds = array<i64: 8, 128>}, {transform_indices = @transform_3, window_bounds = array<i64: 2, 32>}]} {
    %c0 = arith.constant 0 : index
    %c0_0 = arith.constant 0 : index
    %c0_1 = arith.constant 0 : index
    %0 = vector.load %arg1[%c0, %c0_0, %c0_1] : memref<2x8x32xf32, #tpu.memory_space<vmem>>, vector<2x8x32xf32>
    %1 = vector.shape_cast %0 : vector<2x8x32xf32> to vector<16x32xf32>
    %c0_2 = arith.constant 0 : index
    %c0_3 = arith.constant 0 : index
    %2 = vector.load %arg2[%c0_2, %c0_3] : memref<32x128xf32, #tpu.memory_space<vmem>>, vector<32x128xf32>
    %cst = arith.constant dense<0.000000e+00> : vector<16x128xf32>
    %3 = tpu.matmul %1, %2, %cst {dimension_numbers = #tpu.dot_dimension_numbers<[1], [0], [0], [1], [0, 0, 1, 1], [], []>} : vector<16x32xf32>, vector<32x128xf32>, vector<16x128xf32> -> vector<16x128xf32>
    %4 = vector.shape_cast %3 : vector<16x128xf32> to vector<2x8x128xf32>
    %c0_4 = arith.constant 0 : index
    %c0_5 = arith.constant 0 : index
    %5 = vector.load %arg3[%c0_4, %c0_5] : memref<8x128xf32, #tpu.memory_space<vmem>>, vector<8x128xf32>
    %6 = vector.shape_cast %5 : vector<8x128xf32> to vector<1x8x128xf32>
    %7 = vector.broadcast %6 : vector<1x8x128xf32> to vector<2x8x128xf32>
    %8 = arith.addf %4, %7 : vector<2x8x128xf32>
    %9 = math.tanh %8 : vector<2x8x128xf32>
    %10 = math.exp %9 : vector<2x8x128xf32>
    %cst_6 = arith.constant dense<0.000000e+00> : vector<2x128xf32>
    %11 = vector.multi_reduction <add>, %10, %cst_6 [1] : vector<2x8x128xf32> to vector<2x128xf32>
    %12 = vector.shape_cast %11 : vector<2x128xf32> to vector<2x1x128xf32>
    %13 = tpu.reciprocal %12 : vector<2x1x128xf32> -> vector<2x1x128xf32>
    %14 = vector.broadcast %13 : vector<2x1x128xf32> to vector<2x8x128xf32>
    %15 = arith.mulf %10, %14 : vector<2x8x128xf32>
    %cst_7 = arith.constant 1.000000e-10 : f32
    %16 = vector.broadcast %cst_7 : f32 to vector<2x8x128xf32>
    %17 = arith.addf %15, %16 : vector<2x8x128xf32>
    %18 = vector.extract_strided_slice %17 {offsets = [0, 0, 0], sizes = [2, 8, 32], strides = [1, 1, 1]} : vector<2x8x128xf32> to vector<2x8x32xf32>
    %19 = arith.mulf %0, %18 : vector<2x8x32xf32>
    %cst_8 = arith.constant dense<0.000000e+00> : vector<2x32xf32>
    %20 = vector.multi_reduction <add>, %19, %cst_8 [1] : vector<2x8x32xf32> to vector<2x32xf32>
    %c0_9 = arith.constant 0 : index
    %c0_10 = arith.constant 0 : index
    %21 = vector.load %arg4[%c0_9, %c0_10] : memref<2x32xf32, #tpu.memory_space<vmem>>, vector<2x32xf32>
    tpu.vector_store %arg4[%c0_9, %c0_10], %20 {strides = array<i32>} : memref<2x32xf32, #tpu.memory_space<vmem>>, vector<2x32xf32>,
    return
  }
  func.func @transform_0(%arg0: i32) -> (i32, i32, i32) {
    %c0_i32 = arith.constant 0 : i32
    %c0_i32_0 = arith.constant 0 : i32
    %c0_i32_1 = arith.constant 0 : i32
    return %arg0, %c0_i32, %c0_i32_0 : i32, i32, i32
  }
  func.func @transform_1(%arg0: i32) -> (i32, i32) {
    %c0_i32 = arith.constant 0 : i32
    %c0_i32_0 = arith.constant 0 : i32
    %c0_i32_1 = arith.constant 0 : i32
    return %c0_i32, %c0_i32_0 : i32, i32
  }
  func.func @transform_2(%arg0: i32) -> (i32, i32) {
    %c0_i32 = arith.constant 0 : i32
    %c0_i32_0 = arith.constant 0 : i32
    %c0_i32_1 = arith.constant 0 : i32
    return %c0_i32, %c0_i32_0 : i32, i32
  }
  func.func @transform_3(%arg0: i32) -> (i32, i32) {
    %c0_i32 = arith.constant 0 : i32
    %c0_i32_0 = arith.constant 0 : i32
    return %arg0, %c0_i32 : i32, i32
  }
}

</mosaic_0001>

<llo_original>
// kernel: tpu_custom_call.1
$region0: #{tpu_custom_call.1}
  #allocation0 [shape = 'u32[]', space=smem, size = 0x4, offset = 0x4, fixed_abs, tag = 'smem constant byte address 0x4 - core index']
  #allocation1 [shape = 'u32[144,128]{1,0:T(1,128)}', space=vmem, size = 0x12000, scoped, tag = 'internal scratch']
  %s0 = inlined_call_operand.hbm [shape: f32[2,8,32], index: 0, kind: input, shape index: {}]
  %s1 = inlined_call_operand.hbm [shape: f32[32,128], index: 1, kind: input, shape index: {}]
  %s2 = inlined_call_operand.hbm [shape: f32[8,128], index: 2, kind: input, shape index: {}]
  %s3 = inlined_call_operand.hbm [shape: f32[2,32], index: 3, kind: output, shape index: {}]
  %s4 = sld [smem:[#allocation0]]
  $region34: #{tpu_custom_call.1} parent=0
    _
  %s6 = ssub.s32 1, %s4
  %s7 = scalar_select 0, %s6, %s4
  $region1: #{tpu_custom_call.1} parent=0
    #allocation2 [shape = 'u8[8192]{0}', space=vmem, size = 0x2000, scoped, tag = 'input window, operand 0, single buffered']
    #allocation3 [shape = 's32[1]{0}', space=sflag, size = 0x4, scoped, tag = 'scoped memory for tpu_custom_call.1']
    #allocation4 [shape = 's32[1]{0}', space=sflag, size = 0x4, scoped, tag = 'scoped memory for tpu_custom_call.1']
    #allocation5 [shape = 'u8[16384]{0}', space=vmem, size = 0x4000, scoped, tag = 'input window, operand 1, single buffered']
    #allocation6 [shape = 's32[1]{0}', space=sflag, size = 0x4, scoped, tag = 'scoped memory for tpu_custom_call.1']
    #allocation7 [shape = 'u8[4096]{0}', space=vmem, size = 0x1000, scoped, tag = 'input window, operand 2, single buffered']
    #allocation8 [shape = 'u8[1024]{0}', space=vmem, size = 0x400, scoped, tag = 'output window, operand 0, single buffered']
    %8 = vsyncpa [#allocation3], 0
    %9 = vsyncpa [#allocation6], 0
    %10 = vsyncpa [#allocation4], 0
    // Predicated region
    $region2: #{tpu_custom_call.1} parent=1 // pred_check
      _
    $region3: #{tpu_custom_call.1} parent=1 // pred_check_branch
      %12 = sbr.rel (0) target = $region5
    $region4: #{tpu_custom_call.1} parent=1 // pred_region
      %s14 = ssub.s32 256, 256
      %15 = vsyncadd [#allocation3], %s14
      %s16 = sshll.u32 [#allocation2], 4
      %s17 = int_to_ptr.vmem [resolvable:$true] %s16
      %22 = dma.hbm_to_vmem [thread:$0]  %s0, 256, %s17, [#allocation3], 128, 128, 8
    $region5: #{tpu_custom_call.1} parent=1 // pred_fallthru
      _
    // Predicated region
    $region6: #{tpu_custom_call.1} parent=1 // pred_check
      _
    $region7: #{tpu_custom_call.1} parent=1 // pred_check_branch
      %24 = sbr.rel (0) target = $region9
    $region8: #{tpu_custom_call.1} parent=1 // pred_region
      %s26 = ssub.s32 512, 512
      %27 = vsyncadd [#allocation6], %s26
      %s28 = sshll.u32 [#allocation5], 4
      %s29 = int_to_ptr.vmem [resolvable:$true] %s28
      %34 = dma.hbm_to_vmem [thread:$0]  %s1, 512, %s29, [#allocation6], 128, 128, 8
    $region9: #{tpu_custom_call.1} parent=1 // pred_fallthru
      _
    // Predicated region
    $region10: #{tpu_custom_call.1} parent=1 // pred_check
      _
    $region11: #{tpu_custom_call.1} parent=1 // pred_check_branch
      %36 = sbr.rel (0) target = $region13
    $region12: #{tpu_custom_call.1} parent=1 // pred_region
      %s38 = ssub.s32 128, 128
      %39 = vsyncadd [#allocation6], %s38
      %s41 = sshll.u32 [#allocation7], 4
      %s42 = int_to_ptr.vmem [resolvable:$true] %s41
      %44 = dma.hbm_to_vmem [thread:$0]  %s2, 128, %s42, [#allocation6]
    $region13: #{tpu_custom_call.1} parent=1 // pred_fallthru
      _
    // Predicated region
    $region14: #{tpu_custom_call.1} parent=1 // pred_check
      _
    $region15: #{tpu_custom_call.1} parent=1 // pred_check_branch
      %46 = sbr.rel (0) target = $region17
    $region16: #{tpu_custom_call.1} parent=1 // pred_region
      %47 = dma.done [#allocation3], 256
    $region17: #{tpu_custom_call.1} parent=1 // pred_fallthru
      _
    // Predicated region
    $region18: #{tpu_custom_call.1} parent=1 // pred_check
      _
    $region19: #{tpu_custom_call.1} parent=1 // pred_check_branch
      %49 = sbr.rel (0) target = $region21
    $region20: #{tpu_custom_call.1} parent=1 // pred_region
      %50 = dma.done [#allocation6], 512
    $region21: #{tpu_custom_call.1} parent=1 // pred_fallthru
      _
    // Predicated region
    $region22: #{tpu_custom_call.1} parent=1 // pred_check
      _
    $region23: #{tpu_custom_call.1} parent=1 // pred_check_branch
      %52 = sbr.rel (0) target = $region25
    $region24: #{tpu_custom_call.1} parent=1 // pred_region
      %53 = dma.done [#allocation6], 128
    $region25: #{tpu_custom_call.1} parent=1 // pred_fallthru
      _
    %v54 = vld [vmem:[#allocation2] sm:$0xff]
    %v55 = vld [vmem:[#allocation2 + $0x8] sm:$0xff]
    %v56 = vld [vmem:[#allocation5] sm:$0xff]
    %v57 = vld [vmem:[#allocation5 + $0x8] sm:$0xff]
    %v58 = vld [vmem:[#allocation5 + $0x10] sm:$0xff]
    %v59 = vld [vmem:[#allocation5 + $0x18] sm:$0xff]
    %vm60 = vcmask 261120
    %v62 = vsel %vm60, %v54, 0
    %v65 = vsel %vm60, %v55, 0
    %67 = vmatprep.subr.mxu0 0.0
    %68 = vmatpush1.msra.mxu0 0.0
    %69 = vmatprep.subr.mxu0 0.0
    %70 = vmatpush1.msra.mxu0 0.0
    %71 = vmatprep.subr.mxu0 0.0
    %72 = vmatpush1.msra.mxu0 0.0
    %73 = vmatprep.subr.mxu0 0.0
    %74 = vmatpush1.msra.mxu0 0.0
    %75 = vmatprep.subr.mxu0 0.0
    %76 = vmatpush1.msra.mxu0 0.0
    %77 = vmatprep.subr.mxu0 0.0
    %78 = vmatpush1.msra.mxu0 0.0
    %79 = vmatprep.subr.mxu0 0.0
    %80 = vmatpush1.msra.mxu0 0.0
    %81 = vmatprep.subr.mxu0 0.0
    %82 = vmatpush1.msra.mxu0 0.0
    %83 = vmatprep.subr.mxu0 0.0
    %84 = vmatpush1.msra.mxu0 0.0
    %85 = vmatprep.subr.mxu0 0.0
    %86 = vmatpush1.msra.mxu0 0.0
    %87 = vmatprep.subr.mxu0 0.0
    %88 = vmatpush1.msra.mxu0 0.0
    %89 = vmatprep.subr.mxu0 0.0
    %90 = vmatpush1.msra.mxu0 0.0
    %91 = vmatprep.subr.mxu0 0.0
    %92 = vmatpush1.msra.mxu0 %v59
    %93 = vmatprep.subr.mxu0 0.0
    %94 = vmatpush1.msra.mxu0 %v58
    %95 = vmatprep.subr.mxu0 0.0
    %96 = vmatpush1.msra.mxu0 %v57
    %97 = vmatprep.subr.mxu0 0.0
    %98 = vmatpush1.msra.mxu0 %v56
    %99 = vmatprep.subr.mxu0 0.0
    %100 = vmatpush2.msra.mxu0 0.0
    %101 = vmatprep.subr.mxu0 0.0
    %102 = vmatpush2.msra.mxu0 0.0
    %103 = vmatprep.subr.mxu0 0.0
    %104 = vmatpush2.msra.mxu0 0.0
    %105 = vmatprep.subr.mxu0 0.0
    %106 = vmatpush2.msra.mxu0 0.0
    %107 = vmatprep.subr.mxu0 0.0
    %108 = vmatpush2.msra.mxu0 0.0
    %109 = vmatprep.subr.mxu0 0.0
    %110 = vmatpush2.msra.mxu0 0.0
    %111 = vmatprep.subr.mxu0 0.0
    %112 = vmatpush2.msra.mxu0 0.0
    %113 = vmatprep.subr.mxu0 0.0
    %114 = vmatpush2.msra.mxu0 0.0
    %115 = vmatprep.subr.mxu0 0.0
    %116 = vmatpush2.msra.mxu0 0.0
    %117 = vmatprep.subr.mxu0 0.0
    %118 = vmatpush2.msra.mxu0 0.0
    %119 = vmatprep.subr.mxu0 0.0
    %120 = vmatpush2.msra.mxu0 0.0
    %121 = vmatprep.subr.mxu0 0.0
    %122 = vmatpush2.msra.mxu0 0.0
    %123 = vmatprep.subr.mxu0 0.0
    %124 = vmatpush2.msra.mxu0 0.0
    %125 = vmatprep.subr.mxu0 0.0
    %126 = vmatpush2.msra.mxu0 0.0
    %127 = vmatprep.subr.mxu0 0.0
    %128 = vmatpush2.msra.mxu0 0.0
    %129 = vmatprep.subr.mxu0 0.0
    %130 = vmatpush2.msra.mxu0 0.0
    %131 = vmatprep.mubr.f32.mxu0 0.0
    %132 = vmatmul.mubr.f32.gmra.mxu0 %v62
    %v133 = vpop.f32.mrf.mxu0
    %v134 = vadd.f32 0.0, %v133
    %v135 = vpop.f32.mrf.mxu0
    %136 = vmatprep.mubr.f32.mxu0 0.0
    %137 = vmatmul.mubr.f32.gmra.mxu0 %v65
    %v138 = vpop.f32.mrf.mxu0
    %v139 = vadd.f32 0.0, %v138
    %v140 = vpop.f32.mrf.mxu0
    %141 = vdwg.mxu0
    %v142 = vld [vmem:[#allocation7] sm:$0xff]
    %v143 = vadd.f32 %v134, %v142
    %v144 = vadd.f32 %v139, %v142
    %v145 = vtanh.pop %v143
    %v146 = vtanh.pop %v144
    %v147 = vmul.f32 %v145, 1.442695
    %v148 = vpow.pop %v147
    %v149 = vmul.f32 %v146, 1.442695
    %v150 = vpow.pop %v149
    %v151 = vrot.slane %v148, 4
    %v152 = vadd.f32 %v148, %v151
    %v153 = vrot.slane %v152, 2
    %v154 = vadd.f32 %v152, %v153
    %v155 = vrot.slane %v154, 1
    %v156 = vadd.f32 %v154, %v155
    %v157 = vrot.slane %v150, 4
    %v158 = vadd.f32 %v150, %v157
    %v159 = vrot.slane %v158, 2
    %v160 = vadd.f32 %v158, %v159
    %v161 = vrot.slane %v160, 1
    %v162 = vadd.f32 %v160, %v161
    %v163 = vrcp.pop %v156
    %v164 = vrcp.pop %v162
    %v165 = vmul.f32 %v148, %v163
    %v166 = vmul.f32 %v150, %v164
    %v167 = vadd.f32 %v165, 1e-10
    %v168 = vadd.f32 %v166, 1e-10
    %v169 = vmul.f32 %v54, %v167
    %v170 = vmul.f32 %v55, %v168
    %v171 = vsel %vm60, %v169, 0.0
    %v172 = vrot.slane %v171, 4
    %v173 = vadd.f32 %v171, %v172
    %v174 = vrot.slane %v173, 2
    %v175 = vadd.f32 %v173, %v174
    %v176 = vrot.slane %v175, 1
    %v177 = vadd.f32 %v175, %v176
    %v178 = vsel %vm60, %v170, 0.0
    %v179 = vrot.slane %v178, 4
    %v180 = vadd.f32 %v178, %v179
    %v181 = vrot.slane %v180, 2
    %v182 = vadd.f32 %v180, %v181
    %v183 = vrot.slane %v182, 1
    %v184 = vadd.f32 %v182, %v183
    %vm187 = vcmask 1041409
    %v188 = vsel %vm187, %v184, %v177
    %vm190 = vcmask 254976
    %191 = vst.msk [vmem:[#allocation8] sm:$0x3] %vm190, %v188
    // Predicated region
    $region26: #{tpu_custom_call.1} parent=1 // pred_check
      _
    $region27: #{tpu_custom_call.1} parent=1 // pred_check_branch
      %193 = sbr.rel (0) target = $region29
    $region28: #{tpu_custom_call.1} parent=1 // pred_region
      %s195 = ssub.s32 32, 32
      %196 = vsyncadd [#allocation4], %s195
      %s198 = sshll.u32 [#allocation8], 4
      %s199 = int_to_ptr.vmem [resolvable:$true] %s198
      %201 = dma.vmem_to_hbm [thread:$0]  %s199, 32, %s3, [#allocation4]
    $region29: #{tpu_custom_call.1} parent=1 // pred_fallthru
      _
    // Predicated region
    $region30: #{tpu_custom_call.1} parent=1 // pred_check
      _
    $region31: #{tpu_custom_call.1} parent=1 // pred_check_branch
      %203 = sbr.rel (0) target = $region33
    $region32: #{tpu_custom_call.1} parent=1 // pred_region
      %204 = dma.done [#allocation4], 32
    $region33: #{tpu_custom_call.1} parent=1 // pred_fallthru
      _
    %205 = vsyncpa [#allocation3], 1
    %206 = vsyncpa [#allocation6], 1
    %207 = vsyncpa [#allocation4], 1

</llo_original>
